<compile_context>
chip_gen: v7x
topology: tpu7x:2x2x1
jax: 0.10.0
libtpu: 0.0.40
codegen_flags: <defaults>
</compile_context>

<pallas_src>
import jax
import jax.numpy as jnp
from jax.experimental import pallas as pl
from jax.experimental.pallas import tpu as pltpu


def _round_up(x, m):
    return ((x + m - 1) // m) * m


def _vmem_capacity_bytes():
    try:
        cap = getattr(pltpu.get_tpu_info(), "vmem_capacity_bytes", None)
        if cap:
            return int(cap)
    except Exception:
        pass
    return 64 * 1024 * 1024  # conservative fallback (v7x per-TensorCore VMEM)


def _sgc_kernel(x_ref, w_ref, o_ref):
    # x_ref: (tm, nfeat)   streaming node-feature tile (compute dtype, bf16)
    # w_ref: (nfeat, tn)   pre-transposed weight tile (VMEM-resident typically)
    # o_ref: (tm, tn)      lane-dense output tile (f32)
    o_ref[...] = jnp.dot(
        x_ref[...], w_ref[...], preferred_element_type=jnp.float32
    ).astype(o_ref.dtype)


def sgc_forward(x, w, *, tm=1024, compute_dtype=jnp.bfloat16,
                vmem_budget_bytes=None):
    """SGC forward: x @ w.T with w stored PyTorch-style as (nclass, nfeat)."""
    n_nodes, nfeat = x.shape
    nclass, nfeat_w = w.shape
    assert nfeat_w == nfeat

    out_dtype = x.dtype
    out_itemsize = jnp.dtype(out_dtype).itemsize
    cdt_itemsize = jnp.dtype(compute_dtype).itemsize

    # Lane-dense output: pad only the (tiny) class axis to a multiple of 128.
    nclass_p = _round_up(nclass, 128)

    # Generation-aware VMEM budget: ~half of physical VMEM.
    vmem_cap = _vmem_capacity_bytes()
    if vmem_budget_bytes is None:
        vmem_budget_bytes = vmem_cap // 2

    # Class (N) tile: split only when the resident weight would eat more than
    # ~1/3 of the budget (classic SGC heads are tiny, so usually tn == nclass_p).
    tn = nclass_p
    while tn > 128 and 2 * nfeat * tn * cdt_itemsize > vmem_budget_bytes // 3:
        tn = _round_up(tn // 2, 128)
    # TODO(synk): if nfeat alone is so wide that an (8, nfeat) x tile plus an
    # (nfeat, 128) weight tile overflow the budget, a K grid axis with an f32
    # accumulator would be needed; not required for realistic SGC shapes.

    # Node (M) tile: clamp to the problem, keep sublane-aligned, shrink to fit.
    tm = max(8, min(tm, _round_up(n_nodes, 8)))

    def _vmem_bytes(tm_):
        x_bytes = 2 * tm_ * nfeat * cdt_itemsize   # double-buffered x tile
        w_bytes = 2 * nfeat * tn * cdt_itemsize    # (resident) weight tile
        o_bytes = 2 * tm_ * tn * out_itemsize      # double-buffered output tile
        return x_bytes + w_bytes + o_bytes

    while tm > 8 and _vmem_bytes(tm) > vmem_budget_bytes:
        tm = max(8, _round_up(tm // 2, 8))

    # Weight glue (tiny, one-time HBM op): pad class axis, transpose to (K, N),
    # cast to the compute dtype.  x is only cast (no padding, no extra copy of
    # the big operand beyond the dtype conversion).
    w_kn = jnp.pad(w, ((0, nclass_p - nclass), (0, 0))).T.astype(compute_dtype)
    x_c = x.astype(compute_dtype)

    grid = (pl.cdiv(n_nodes, tm), pl.cdiv(nclass_p, tn))

    cost = pl.CostEstimate(
        flops=2 * n_nodes * nclass_p * nfeat,
        transcendentals=0,
        bytes_accessed=(x_c.size * cdt_itemsize
                        + w_kn.size * cdt_itemsize
                        + n_nodes * nclass_p * out_itemsize),
    )

    out_p = pl.pallas_call(
        _sgc_kernel,
        out_shape=jax.ShapeDtypeStruct((n_nodes, nclass_p), out_dtype),
        grid_spec=pltpu.PrefetchScalarGridSpec(
            num_scalar_prefetch=0,
            grid=grid,
            in_specs=[
                # Streaming x tiles over the node axis; the feature axis is the
                # full (unpadded) array dim, and the last node block may be
                # partial (cdiv grid) -- no wrapper-side jnp.pad of x.
                pl.BlockSpec((tm, nfeat), lambda i, j: (i, 0)),
                # Pre-transposed weight: depends only on the class-tile index;
                # with the typical single class tile it is VMEM-resident for
                # the whole grid (constant index_map).
                pl.BlockSpec((nfeat, tn), lambda i, j: (0, j)),
            ],
            out_specs=pl.BlockSpec((tm, tn), lambda i, j: (i, j)),
        ),
        compiler_params=pltpu.CompilerParams(
            dimension_semantics=("parallel", "parallel"),
            vmem_limit_bytes=int(
                min(max(_vmem_bytes(tm) * 5 // 4, 32 * 1024 * 1024),
                    vmem_cap * 3 // 4)
            ),
        ),
        cost_estimate=cost,
    )(x_c, w_kn)

    # Only the tiny class padding is sliced off; rows were never padded.
    return out_p[:, :nclass]


def xavier_normal(key, nclass, nfeat, dtype=jnp.float32):
    # torch.nn.init.xavier_normal_ on a (nclass, nfeat) Linear weight:
    # std = sqrt(2 / (fan_in + fan_out)) = sqrt(2 / (nfeat + nclass))
    std = (2.0 / (nfeat + nclass)) ** 0.5
    return std * jax.random.normal(key, (nclass, nfeat), dtype=dtype)


if __name__ == "__main__":
    key = jax.random.PRNGKey(0)
    k_x1, k_w1, k_x2, k_w2 = jax.random.split(key, 4)

    def _check(num_nodes, nfeat, nclass, kx, kw):
        x = jax.random.normal(kx, (num_nodes, nfeat), dtype=jnp.float32)
        W = xavier_normal(kw, nclass, nfeat)  # (nclass, nfeat), like nn.Linear.weight

        out = jax.block_until_ready(sgc_forward(x, W))
        assert out.shape == (num_nodes, nclass)

        # Reference with the same bf16 input quantization (f32 accumulate).
        xq = x.astype(jnp.bfloat16).astype(jnp.float32)
        wq = W.astype(jnp.bfloat16).astype(jnp.float32)
        ref_q = xq @ wq.T
        assert jnp.allclose(out, ref_q, atol=1e-2, rtol=1e-2)

        # Loose check against the pure-f32 reference (bf16 streaming error).
        ref = x @ W.T
        assert jnp.allclose(out, ref, atol=5e-2, rtol=5e-2)

    # Small, SGC-realistic shapes (tiny class count exercises lane padding).
    _check(128, 256, 7, k_x1, k_w1)
    # Unaligned nodes/features exercise the pad-free cdiv / full-dim-block path.
    _check(100, 200, 3, k_x2, k_w2)

    print("KERNEL_OK")
</pallas_src>

<mosaic_0001>
module attributes {stable_mosaic.version = 11 : i64} {
  func.func @_sgc_kernel(%arg0: i32, %arg1: i32, %arg2: memref<128x256xbf16, #tpu.memory_space<vmem>>, %arg3: memref<256x128xbf16, #tpu.memory_space<vmem>>, %arg4: memref<128x128xf32, #tpu.memory_space<vmem>>) attributes {dimension_semantics = [#tpu.dimension_semantics<parallel>, #tpu.dimension_semantics<parallel>], iteration_bounds = array<i64: 1, 1>, scalar_prefetch = 0 : i64, scratch_operands = 0 : i64, tpu.core_type = #tpu.core_type<tc>, window_params = [{transform_indices = @transform_0, window_bounds = array<i64: 128, 256>}, {transform_indices = @transform_1, window_bounds = array<i64: 256, 128>}, {transform_indices = @transform_2, window_bounds = array<i64: 128, 128>}]} {
    %c0 = arith.constant 0 : index
    %c0_0 = arith.constant 0 : index
    %0 = vector.load %arg2[%c0, %c0_0] : memref<128x256xbf16, #tpu.memory_space<vmem>>, vector<128x256xbf16>
    %c0_1 = arith.constant 0 : index
    %c0_2 = arith.constant 0 : index
    %1 = vector.load %arg3[%c0_1, %c0_2] : memref<256x128xbf16, #tpu.memory_space<vmem>>, vector<256x128xbf16>
    %cst = arith.constant dense<0.000000e+00> : vector<128x128xf32>
    %2 = tpu.matmul %0, %1, %cst {dimension_numbers = #tpu.dot_dimension_numbers<[1], [0], [0], [1], [0, 0, 1, 1], [], []>} : vector<128x256xbf16>, vector<256x128xbf16>, vector<128x128xf32> -> vector<128x128xf32>
    %c0_3 = arith.constant 0 : index
    %c0_4 = arith.constant 0 : index
    %3 = vector.load %arg4[%c0_3, %c0_4] : memref<128x128xf32, #tpu.memory_space<vmem>>, vector<128x128xf32>
    tpu.vector_store %arg4[%c0_3, %c0_4], %2 {strides = array<i32>} : memref<128x128xf32, #tpu.memory_space<vmem>>, vector<128x128xf32>,
    return
  }
  func.func @transform_0(%arg0: i32, %arg1: i32) -> (i32, i32) {
    %c0_i32 = arith.constant 0 : i32
    %c0_i32_0 = arith.constant 0 : i32
    return %arg0, %c0_i32 : i32, i32
  }
  func.func @transform_1(%arg0: i32, %arg1: i32) -> (i32, i32) {
    %c0_i32 = arith.constant 0 : i32
    %c0_i32_0 = arith.constant 0 : i32
    return %c0_i32, %arg1 : i32, i32
  }
  func.func @transform_2(%arg0: i32, %arg1: i32) -> (i32, i32) {
    %c0_i32 = arith.constant 0 : i32
    return %arg0, %arg1 : i32, i32
  }
}

</mosaic_0001>

<llo_original>
// kernel: tpu_custom_call.1
$region0: #{tpu_custom_call.1}
  #allocation0 [shape = 'u32[]', space=smem, size = 0x4, offset = 0x4, fixed_abs, tag = 'smem constant byte address 0x4 - core index']
  #allocation1 [shape = 'u32[144,128]{1,0:T(1,128)}', space=vmem, size = 0x12000, scoped, tag = 'internal scratch']
  %s0 = inlined_call_operand.hbm [shape: bf16[128,256], index: 0, kind: input, shape index: {}]
  %s1 = inlined_call_operand.hbm [shape: bf16[256,128], index: 1, kind: input, shape index: {}]
  %s2 = inlined_call_operand.hbm [shape: f32[128,128], index: 2, kind: output, shape index: {}]
  %s3 = sld [smem:[#allocation0]]
  $region26: #{tpu_custom_call.1} parent=0
    _
  %s5 = ssub.s32 1, %s3
  %s6 = scalar_select 0, %s5, %s3
  $region1: #{tpu_custom_call.1} parent=0
    #allocation2 [shape = 'u8[65536]{0}', space=vmem, size = 0x10000, scoped, tag = 'input window, operand 0, single buffered']
    #allocation3 [shape = 's32[1]{0}', space=sflag, size = 0x4, scoped, tag = 'scoped memory for tpu_custom_call.1']
    #allocation4 [shape = 's32[1]{0}', space=sflag, size = 0x4, scoped, tag = 'scoped memory for tpu_custom_call.1']
    #allocation5 [shape = 'u8[65536]{0}', space=vmem, size = 0x10000, scoped, tag = 'input window, operand 1, single buffered']
    #allocation6 [shape = 's32[1]{0}', space=sflag, size = 0x4, scoped, tag = 'scoped memory for tpu_custom_call.1']
    #allocation7 [shape = 'u8[65536]{0}', space=vmem, size = 0x10000, scoped, tag = 'output window, operand 0, single buffered']
    %7 = vsyncpa [#allocation3], 0
    %8 = vsyncpa [#allocation6], 0
    %9 = vsyncpa [#allocation4], 0
    // Predicated region
    $region2: #{tpu_custom_call.1} parent=1 // pred_check
      _
    $region3: #{tpu_custom_call.1} parent=1 // pred_check_branch
      %11 = sbr.rel (0) target = $region5
    $region4: #{tpu_custom_call.1} parent=1 // pred_region
      %s13 = ssub.s32 2048, 2048
      %14 = vsyncadd [#allocation3], %s13
      %s15 = sshll.u32 [#allocation2], 4
      %s16 = int_to_ptr.vmem [resolvable:$true] %s15
      %21 = dma.hbm_to_vmem [thread:$0]  %s0, 2048, %s16, [#allocation3], 128, 128, 8
    $region5: #{tpu_custom_call.1} parent=1 // pred_fallthru
      _
    // Predicated region
    $region6: #{tpu_custom_call.1} parent=1 // pred_check
      _
    $region7: #{tpu_custom_call.1} parent=1 // pred_check_branch
      %23 = sbr.rel (0) target = $region9
    $region8: #{tpu_custom_call.1} parent=1 // pred_region
      %s25 = ssub.s32 2048, 2048
      %26 = vsyncadd [#allocation6], %s25
      %s27 = sshll.u32 [#allocation5], 4
      %s28 = int_to_ptr.vmem [resolvable:$true] %s27
      %33 = dma.hbm_to_vmem [thread:$0]  %s1, 2048, %s28, [#allocation6], 64, 64, 4
    $region9: #{tpu_custom_call.1} parent=1 // pred_fallthru
      _
    // Predicated region
    $region10: #{tpu_custom_call.1} parent=1 // pred_check
      _
    $region11: #{tpu_custom_call.1} parent=1 // pred_check_branch
      %35 = sbr.rel (0) target = $region13
    $region12: #{tpu_custom_call.1} parent=1 // pred_region
      %36 = dma.done [#allocation3], 2048
    $region13: #{tpu_custom_call.1} parent=1 // pred_fallthru
      _
    // Predicated region
    $region14: #{tpu_custom_call.1} parent=1 // pred_check
      _
    $region15: #{tpu_custom_call.1} parent=1 // pred_check_branch
      %38 = sbr.rel (0) target = $region17
    $region16: #{tpu_custom_call.1} parent=1 // pred_region
      %39 = dma.done [#allocation6], 2048
    $region17: #{tpu_custom_call.1} parent=1 // pred_fallthru
      _
    %v41 = vld [vmem:[#allocation2] sm:$0xff]
    %v42 = vld [vmem:[#allocation2 + $0x8] sm:$0xff]
    %v43 = vld [vmem:[#allocation2 + $0x10] sm:$0xff]
    %v44 = vld [vmem:[#allocation2 + $0x18] sm:$0xff]
    %v45 = vld [vmem:[#allocation2 + $0x20] sm:$0xff]
    %v46 = vld [vmem:[#allocation2 + $0x28] sm:$0xff]
    %v47 = vld [vmem:[#allocation2 + $0x30] sm:$0xff]
    %v48 = vld [vmem:[#allocation2 + $0x38] sm:$0xff]
    %v49 = vld [vmem:[#allocation2 + $0x40] sm:$0xff]
    %v50 = vld [vmem:[#allocation2 + $0x48] sm:$0xff]
    %v51 = vld [vmem:[#allocation2 + $0x50] sm:$0xff]
    %v52 = vld [vmem:[#allocation2 + $0x58] sm:$0xff]
    %v53 = vld [vmem:[#allocation2 + $0x60] sm:$0xff]
    %v54 = vld [vmem:[#allocation2 + $0x68] sm:$0xff]
    %v55 = vld [vmem:[#allocation2 + $0x70] sm:$0xff]
    %v56 = vld [vmem:[#allocation2 + $0x78] sm:$0xff]
    %v57 = vld [vmem:[#allocation5] sm:$0xf]
    %v58 = vld [vmem:[#allocation5 + $0x4] sm:$0xf]
    %v59 = vld [vmem:[#allocation5 + $0x8] sm:$0xf]
    %v60 = vld [vmem:[#allocation5 + $0xc] sm:$0xf]
    %v61 = vld [vmem:[#allocation5 + $0x10] sm:$0xf]
    %v62 = vld [vmem:[#allocation5 + $0x14] sm:$0xf]
    %v63 = vld [vmem:[#allocation5 + $0x18] sm:$0xf]
    %v64 = vld [vmem:[#allocation5 + $0x1c] sm:$0xf]
    %v65 = vld [vmem:[#allocation5 + $0x20] sm:$0xf]
    %v66 = vld [vmem:[#allocation5 + $0x24] sm:$0xf]
    %v67 = vld [vmem:[#allocation5 + $0x28] sm:$0xf]
    %v68 = vld [vmem:[#allocation5 + $0x2c] sm:$0xf]
    %v69 = vld [vmem:[#allocation5 + $0x30] sm:$0xf]
    %v70 = vld [vmem:[#allocation5 + $0x34] sm:$0xf]
    %v71 = vld [vmem:[#allocation5 + $0x38] sm:$0xf]
    %v72 = vld [vmem:[#allocation5 + $0x3c] sm:$0xf]
    %v73 = vld [vmem:[#allocation5 + $0x40] sm:$0xf]
    %v74 = vld [vmem:[#allocation5 + $0x44] sm:$0xf]
    %v75 = vld [vmem:[#allocation5 + $0x48] sm:$0xf]
    %v76 = vld [vmem:[#allocation5 + $0x4c] sm:$0xf]
    %v77 = vld [vmem:[#allocation5 + $0x50] sm:$0xf]
    %v78 = vld [vmem:[#allocation5 + $0x54] sm:$0xf]
    %v79 = vld [vmem:[#allocation5 + $0x58] sm:$0xf]
    %v80 = vld [vmem:[#allocation5 + $0x5c] sm:$0xf]
    %v81 = vld [vmem:[#allocation5 + $0x60] sm:$0xf]
    %v82 = vld [vmem:[#allocation5 + $0x64] sm:$0xf]
    %v83 = vld [vmem:[#allocation5 + $0x68] sm:$0xf]
    %v84 = vld [vmem:[#allocation5 + $0x6c] sm:$0xf]
    %v85 = vld [vmem:[#allocation5 + $0x70] sm:$0xf]
    %v86 = vld [vmem:[#allocation5 + $0x74] sm:$0xf]
    %v87 = vld [vmem:[#allocation5 + $0x78] sm:$0xf]
    %v88 = vld [vmem:[#allocation5 + $0x7c] sm:$0xf]
    %v105 = vunpack.c.l.b16 %v41
    %v106 = vunpack.c.h.b16 %v41
    %v107 = vunpack.c.l.b16 %v42
    %v108 = vunpack.c.h.b16 %v42
    %v109 = vunpack.c.l.b16 %v43
    %v110 = vunpack.c.h.b16 %v43
    %v111 = vunpack.c.l.b16 %v44
    %v112 = vunpack.c.h.b16 %v44
    %v113 = vunpack.c.l.b16 %v45
    %v114 = vunpack.c.h.b16 %v45
    %v115 = vunpack.c.l.b16 %v46
    %v116 = vunpack.c.h.b16 %v46
    %v117 = vunpack.c.l.b16 %v47
    %v118 = vunpack.c.h.b16 %v47
    %v119 = vunpack.c.l.b16 %v48
    %v120 = vunpack.c.h.b16 %v48
    %v121 = vunpack.c.l.b16 %v49
    %v122 = vunpack.c.h.b16 %v49
    %v123 = vunpack.c.l.b16 %v50
    %v124 = vunpack.c.h.b16 %v50
    %v125 = vunpack.c.l.b16 %v51
    %v126 = vunpack.c.h.b16 %v51
    %v127 = vunpack.c.l.b16 %v52
    %v128 = vunpack.c.h.b16 %v52
    %v129 = vunpack.c.l.b16 %v53
    %v130 = vunpack.c.h.b16 %v53
    %v131 = vunpack.c.l.b16 %v54
    %v132 = vunpack.c.h.b16 %v54
    %v133 = vunpack.c.l.b16 %v55
    %v134 = vunpack.c.h.b16 %v55
    %v135 = vunpack.c.l.b16 %v56
    %v136 = vunpack.c.h.b16 %v56
    %v137 = vpack.c.b16 %v107, %v105
    %v138 = vpack.c.b16 %v108, %v106
    %v139 = vpack.c.b16 %v111, %v109
    %v140 = vpack.c.b16 %v112, %v110
    %v141 = vpack.c.b16 %v115, %v113
    %v142 = vpack.c.b16 %v116, %v114
    %v143 = vpack.c.b16 %v119, %v117
    %v144 = vpack.c.b16 %v120, %v118
    %v145 = vpack.c.b16 %v123, %v121
    %v146 = vpack.c.b16 %v124, %v122
    %v147 = vpack.c.b16 %v127, %v125
    %v148 = vpack.c.b16 %v128, %v126
    %v149 = vpack.c.b16 %v131, %v129
    %v150 = vpack.c.b16 %v132, %v130
    %v151 = vpack.c.b16 %v135, %v133
    %v152 = vpack.c.b16 %v136, %v134
    %v201 = vunpack.c.l.b16 %v57
    %v202 = vunpack.c.l.b16 %v58
    %v203 = vunpack.c.l.b16 %v59
    %v204 = vunpack.c.l.b16 %v60
    %v205 = vunpack.c.l.b16 %v61
    %v206 = vunpack.c.l.b16 %v62
    %v207 = vunpack.c.l.b16 %v63
    %v208 = vunpack.c.l.b16 %v64
    %v209 = vunpack.c.l.b16 %v65
    %v210 = vunpack.c.l.b16 %v66
    %v211 = vunpack.c.l.b16 %v67
    %v212 = vunpack.c.l.b16 %v68
    %v213 = vunpack.c.l.b16 %v69
    %v214 = vunpack.c.l.b16 %v70
    %v215 = vunpack.c.l.b16 %v71
    %v216 = vunpack.c.l.b16 %v72
    %v217 = vunpack.c.l.b16 %v73
    %v218 = vunpack.c.l.b16 %v74
    %v219 = vunpack.c.l.b16 %v75
    %v220 = vunpack.c.l.b16 %v76
    %v221 = vunpack.c.l.b16 %v77
    %v222 = vunpack.c.l.b16 %v78
    %v223 = vunpack.c.l.b16 %v79
    %v224 = vunpack.c.l.b16 %v80
    %v225 = vunpack.c.l.b16 %v81
    %v226 = vunpack.c.l.b16 %v82
    %v227 = vunpack.c.l.b16 %v83
    %v228 = vunpack.c.l.b16 %v84
    %v229 = vunpack.c.l.b16 %v85
    %v230 = vunpack.c.l.b16 %v86
    %v231 = vunpack.c.l.b16 %v87
    %v232 = vunpack.c.l.b16 %v88
    %v233 = vpack.c.b16 %v202, %v201
    %v234 = vpack.c.b16 %v204, %v203
    %v235 = vpack.c.b16 %v206, %v205
    %v236 = vpack.c.b16 %v208, %v207
    %v237 = vpack.c.b16 %v210, %v209
    %v238 = vpack.c.b16 %v212, %v211
    %v239 = vpack.c.b16 %v214, %v213
    %v240 = vpack.c.b16 %v216, %v215
    %v241 = vpack.c.b16 %v218, %v217
    %v242 = vpack.c.b16 %v220, %v219
    %v243 = vpack.c.b16 %v222, %v221
    %v244 = vpack.c.b16 %v224, %v223
    %v245 = vpack.c.b16 %v226, %v225
    %v246 = vpack.c.b16 %v228, %v227
    %v247 = vpack.c.b16 %v230, %v229
    %v248 = vpack.c.b16 %v232, %v231
    %265 = vmatprep.subr.bf16.mxu0 0
    %266 = vmatpush1.bf16.msra.mxu0 %v233
    %267 = vmatprep.subr.bf16.mxu0 0
    %268 = vmatpush1.bf16.msra.mxu0 %v234
    %269 = vmatprep.subr.bf16.mxu0 0
    %270 = vmatpush1.bf16.msra.mxu0 %v235
    %271 = vmatprep.subr.bf16.mxu0 0
    %272 = vmatpush1.bf16.msra.mxu0 %v236
    %273 = vmatprep.subr.bf16.mxu0 0
    %274 = vmatpush1.bf16.msra.mxu0 %v237
    %275 = vmatprep.subr.bf16.mxu0 0
    %276 = vmatpush1.bf16.msra.mxu0 %v238
    %277 = vmatprep.subr.bf16.mxu0 0
    %278 = vmatpush1.bf16.msra.mxu0 %v239
    %279 = vmatprep.subr.bf16.mxu0 0
    %280 = vmatpush1.bf16.msra.mxu0 %v240
    %281 = vmatprep.subr.bf16.mxu0 0
    %282 = vmatpush1.bf16.msra.mxu0 %v241
    %283 = vmatprep.subr.bf16.mxu0 0
    %284 = vmatpush1.bf16.msra.mxu0 %v242
    %285 = vmatprep.subr.bf16.mxu0 0
    %286 = vmatpush1.bf16.msra.mxu0 %v243
    %287 = vmatprep.subr.bf16.mxu0 0
    %288 = vmatpush1.bf16.msra.mxu0 %v244
    %289 = vmatprep.subr.bf16.mxu0 0
    %290 = vmatpush1.bf16.msra.mxu0 %v245
    %291 = vmatprep.subr.bf16.mxu0 0
    %292 = vmatpush1.bf16.msra.mxu0 %v246
    %293 = vmatprep.subr.bf16.mxu0 0
    %294 = vmatpush1.bf16.msra.mxu0 %v247
    %295 = vmatprep.subr.bf16.mxu0 0
    %296 = vmatpush1.bf16.msra.mxu0 %v248
    %297 = vmatprep.mubr.bf16.mxu0 %v138
    %298 = vmatmul.mubr.bf16.gmra.mrb[0].mxu0 %v137
    %v299 = vpop.f32.mrb[0].mxu0
    %v300 = vadd.f32 0.0, %v299
    %v301 = vpop.f32.mrb[0].mxu0
    %v302 = vpop.f32.mrb[0].mxu0
    %v303 = vadd.f32 0.0, %v302
    %v304 = vpop.f32.mrb[0].mxu0
    %305 = vmatprep.mubr.bf16.mxu0 %v140
    %306 = vmatmul.mubr.bf16.gmra.mrb[0].mxu0 %v139
    %v307 = vpop.f32.mrb[0].mxu0
    %v308 = vadd.f32 0.0, %v307
    %v309 = vpop.f32.mrb[0].mxu0
    %v310 = vpop.f32.mrb[0].mxu0
    %v311 = vadd.f32 0.0, %v310
    %v312 = vpop.f32.mrb[0].mxu0
    %313 = vmatprep.mubr.bf16.mxu0 %v142
    %314 = vmatmul.mubr.bf16.gmra.mrb[0].mxu0 %v141
    %v315 = vpop.f32.mrb[0].mxu0
    %v316 = vadd.f32 0.0, %v315
    %v317 = vpop.f32.mrb[0].mxu0
    %v318 = vpop.f32.mrb[0].mxu0
    %v319 = vadd.f32 0.0, %v318
    %v320 = vpop.f32.mrb[0].mxu0
    %321 = vmatprep.mubr.bf16.mxu0 %v144
    %322 = vmatmul.mubr.bf16.gmra.mrb[0].mxu0 %v143
    %v323 = vpop.f32.mrb[0].mxu0
    %v324 = vadd.f32 0.0, %v323
    %v325 = vpop.f32.mrb[0].mxu0
    %v326 = vpop.f32.mrb[0].mxu0
    %v327 = vadd.f32 0.0, %v326
    %v328 = vpop.f32.mrb[0].mxu0
    %329 = vmatprep.mubr.bf16.mxu0 %v146
    %330 = vmatmul.mubr.bf16.gmra.mrb[0].mxu0 %v145
    %v331 = vpop.f32.mrb[0].mxu0
    %v332 = vadd.f32 0.0, %v331
    %v333 = vpop.f32.mrb[0].mxu0
    %v334 = vpop.f32.mrb[0].mxu0
    %v335 = vadd.f32 0.0, %v334
    %v336 = vpop.f32.mrb[0].mxu0
    %337 = vmatprep.mubr.bf16.mxu0 %v148
    %338 = vmatmul.mubr.bf16.gmra.mrb[0].mxu0 %v147
    %v339 = vpop.f32.mrb[0].mxu0
    %v340 = vadd.f32 0.0, %v339
    %v341 = vpop.f32.mrb[0].mxu0
    %v342 = vpop.f32.mrb[0].mxu0
    %v343 = vadd.f32 0.0, %v342
    %v344 = vpop.f32.mrb[0].mxu0
    %345 = vmatprep.mubr.bf16.mxu0 %v150
    %346 = vmatmul.mubr.bf16.gmra.mrb[0].mxu0 %v149
    %v347 = vpop.f32.mrb[0].mxu0
    %v348 = vadd.f32 0.0, %v347
    %v349 = vpop.f32.mrb[0].mxu0
    %v350 = vpop.f32.mrb[0].mxu0
    %v351 = vadd.f32 0.0, %v350
    %v352 = vpop.f32.mrb[0].mxu0
    %353 = vmatprep.mubr.bf16.mxu0 %v152
    %354 = vmatmul.mubr.bf16.gmra.mrb[0].mxu0 %v151
    %v355 = vpop.f32.mrb[0].mxu0
    %v356 = vadd.f32 0.0, %v355
    %v357 = vpop.f32.mrb[0].mxu0
    %v358 = vpop.f32.mrb[0].mxu0
    %v359 = vadd.f32 0.0, %v358
    %v360 = vpop.f32.mrb[0].mxu0
    %361 = vdwg.mxu0
    %362 = vst [vmem:[#allocation7] sm:$0xff] %v300
    %363 = vst [vmem:[#allocation7 + $0x8] sm:$0xff] %v303
    %364 = vst [vmem:[#allocation7 + $0x10] sm:$0xff] %v308
    %365 = vst [vmem:[#allocation7 + $0x18] sm:$0xff] %v311
    %366 = vst [vmem:[#allocation7 + $0x20] sm:$0xff] %v316
    %367 = vst [vmem:[#allocation7 + $0x28] sm:$0xff] %v319
    %368 = vst [vmem:[#allocation7 + $0x30] sm:$0xff] %v324
    %369 = vst [vmem:[#allocation7 + $0x38] sm:$0xff] %v327
    %370 = vst [vmem:[#allocation7 + $0x40] sm:$0xff] %v332
    %371 = vst [vmem:[#allocation7 + $0x48] sm:$0xff] %v335
    %372 = vst [vmem:[#allocation7 + $0x50] sm:$0xff] %v340
    %373 = vst [vmem:[#allocation7 + $0x58] sm:$0xff] %v343
    %374 = vst [vmem:[#allocation7 + $0x60] sm:$0xff] %v348
    %375 = vst [vmem:[#allocation7 + $0x68] sm:$0xff] %v351
    %376 = vst [vmem:[#allocation7 + $0x70] sm:$0xff] %v356
    %377 = vst [vmem:[#allocation7 + $0x78] sm:$0xff] %v359
    // Predicated region
    $region18: #{tpu_custom_call.1} parent=1 // pred_check
      _
    $region19: #{tpu_custom_call.1} parent=1 // pred_check_branch
      %379 = sbr.rel (0) target = $region21
    $region20: #{tpu_custom_call.1} parent=1 // pred_region
      %s381 = ssub.s32 2048, 2048
      %382 = vsyncadd [#allocation4], %s381
      %s383 = sshll.u32 [#allocation7], 4
      %s384 = int_to_ptr.vmem [resolvable:$true] %s383
      %389 = dma.vmem_to_hbm [thread:$0]  %s384, 2048, %s2, [#allocation4], 128, 128, 8
    $region21: #{tpu_custom_call.1} parent=1 // pred_fallthru
      _
    // Predicated region
    $region22: #{tpu_custom_call.1} parent=1 // pred_check
      _
    $region23: #{tpu_custom_call.1} parent=1 // pred_check_branch
      %391 = sbr.rel (0) target = $region25
    $region24: #{tpu_custom_call.1} parent=1 // pred_region
      %392 = dma.done [#allocation4], 2048
    $region25: #{tpu_custom_call.1} parent=1 // pred_fallthru
      _
    %393 = vsyncpa [#allocation3], 1
    %394 = vsyncpa [#allocation6], 1
    %395 = vsyncpa [#allocation4], 1

</llo_original>
